<compile_context>
chip_gen: v7x
topology: tpu7x:2x2x1
jax: 0.10.0
libtpu: 0.0.40
codegen_flags: <defaults>
</compile_context>

<pallas_src>
import functools

import jax
import jax.numpy as jnp
from jax.experimental import pallas as pl
from jax.experimental.pallas import tpu as pltpu

MARGIN = 1.0
EPS = 1e-7  # matches nn.TripletMarginLoss(..., eps=1e-07)


def _round_up(x, m):
    return ((x + m - 1) // m) * m


def _ceil_div(a, b):
    return (a + b - 1) // b


def _tpu_vmem_capacity_bytes():
    """Per-TensorCore VMEM capacity; conservative fallback if the query fails."""
    try:
        return int(pltpu.get_tpu_info().vmem_capacity_bytes)
    except Exception:
        return 128 << 20


def _triplet_kernel(a_ref, p_ref, n_ref, o_ref, acc_ref, *, n_rows, tile_rows,
                    tiles_per_split):
    s = pl.program_id(0)   # batch split ("parallel" axis; one per TensorCore)
    i = pl.program_id(1)   # tile within split ("arbitrary" accumulation axis)

    # f32 VMEM accumulator, resident across the inner axis.
    @pl.when(i == 0)
    def _init():
        acc_ref[...] = jnp.zeros_like(acc_ref)

    # Subtract in the native input dtype and cast the single diff to f32
    # (one cast instead of three; torch also subtracts in the input dtype).
    a = a_ref[...]
    dp_diff = (a - p_ref[...]).astype(jnp.float32) + EPS
    dn_diff = (a - n_ref[...]).astype(jnp.float32) + EPS

    # PyTorch pairwise_distance: ||x1 - x2 + eps||_2 (eps added elementwise).
    dp = jnp.sqrt(jnp.sum(dp_diff * dp_diff, axis=-1, keepdims=True))  # (TB, 1)
    dn = jnp.sqrt(jnp.sum(dn_diff * dn_diff, axis=-1, keepdims=True))  # (TB, 1)
    loss = jnp.maximum(dp - dn + MARGIN, 0.0)                          # (TB, 1)

    start = (s * tiles_per_split + i) * tile_rows
    is_tail = start + tile_rows > n_rows

    # Interior tiles: plain reduce — only the (at most one) tail tile pays for
    # the lane-sparse iota/compare/where mask.
    @pl.when(jnp.logical_not(is_tail))
    def _interior():
        acc_ref[...] += jnp.sum(loss, keepdims=True)

    @pl.when(is_tail)
    def _tail():
        row = jax.lax.broadcasted_iota(jnp.int32, (tile_rows, 1), 0) + start
        masked = jnp.where(row < n_rows, loss, 0.0)
        acc_ref[...] += jnp.sum(masked, keepdims=True)

    # Single SMEM write per split, at the end of the accumulation axis.
    @pl.when(i == tiles_per_split - 1)
    def _finalize():
        o_ref[0, 0] = jnp.sum(acc_ref[...])


def triplet_loss(anchor_cls, positive_cls, negative_cls, *, tile_rows=None):
    """Pallas equivalent of TripletLoss.forward({'anchor_cls': ..., ...})."""
    assert anchor_cls.shape == positive_cls.shape == negative_cls.shape
    assert anchor_cls.ndim == 2, "expected (batch, feature) embeddings"

    n_rows, d = anchor_cls.shape
    itemsize = jnp.dtype(anchor_cls.dtype).itemsize

    # --- generation-aware VMEM budget -------------------------------------
    vmem_cap = _tpu_vmem_capacity_bytes()              # 128 MiB (v5e/v6e) / 64 MiB (v7x)
    vmem_limit = min((vmem_cap * 3) // 4, 96 << 20)    # scoped: 96 MiB / 48 MiB
    # 3 inputs x 2 pipeline buffers; leave slack for scratch / outputs.
    per_block_budget = min(max(1 << 17, (vmem_limit - (4 << 20)) // 6), 4 << 20)

    if tile_rows is None:
        row_bytes = max(1, d * itemsize)
        tb = max(8, (per_block_budget // row_bytes) // 8 * 8)
        tile_rows = max(8, min(tb, _round_up(n_rows, 8)))
    else:
        tile_rows = max(8, _round_up(int(tile_rows), 8))

    total_tiles = _ceil_div(n_rows, tile_rows)

    # --- split across TensorCores only where there are 2 of them (v7x) -----
    # v7x exposes 64 MiB VMEM per TensorCore (and has 2 TCs); v5e/v6e expose
    # 128 MiB (1 TC).  On single-TC chips a "parallel" split is just a second
    # serial loop, so skip it.
    num_splits = 2 if vmem_cap <= (64 << 20) else 1
    if num_splits > 1:
        if total_tiles < num_splits:
            num_splits = 1
        elif total_tiles % num_splits != 0:
            # Shrink tile_rows so the tile count divides evenly between the two
            # cores -> no duplicated (clamped + masked) tile, no wasted DMA.
            want = _round_up(total_tiles, num_splits)
            tr = _round_up(_ceil_div(n_rows, want), 8)
            new_total = _ceil_div(n_rows, tr)
            if new_total % num_splits == 0:
                tile_rows, total_tiles = tr, new_total
            else:
                num_splits = 1
    tiles_per_split = total_tiles // num_splits

    kernel = functools.partial(
        _triplet_kernel,
        n_rows=n_rows,
        tile_rows=tile_rows,
        tiles_per_split=tiles_per_split,
    )

    # No clamp needed: total_tiles is an exact multiple of num_splits.
    in_spec = pl.BlockSpec((tile_rows, d),
                           lambda s, i: (s * tiles_per_split + i, 0))

    partial_sums = pl.pallas_call(
        kernel,
        out_shape=jax.ShapeDtypeStruct((num_splits, 1), jnp.float32),
        grid=(num_splits, tiles_per_split),
        in_specs=[in_spec, in_spec, in_spec],
        out_specs=pl.BlockSpec((1, 1), lambda s, i: (s, 0),
                               memory_space=pltpu.SMEM),
        scratch_shapes=[pltpu.VMEM((1, 1), jnp.float32)],
        compiler_params=pltpu.CompilerParams(
            dimension_semantics=("parallel", "arbitrary"),
            vmem_limit_bytes=int(vmem_limit),
        ),
    )(anchor_cls, positive_cls, negative_cls)

    # reduction='mean': divide the accumulated sum by N exactly once.
    return jnp.sum(partial_sums) / jnp.float32(n_rows)


def _reference(a, p, n):
    # Pure-JAX reference mirroring nn.TripletMarginLoss semantics.
    a = a.astype(jnp.float32)
    p = p.astype(jnp.float32)
    n = n.astype(jnp.float32)
    dp = jnp.sqrt(jnp.sum((a - p + EPS) ** 2, axis=-1))
    dn = jnp.sqrt(jnp.sum((a - n + EPS) ** 2, axis=-1))
    return jnp.mean(jnp.maximum(dp - dn + MARGIN, 0.0))


if __name__ == "__main__":
    # Small shape consistent with the module: (batch, hidden) class embeddings.
    key = jax.random.PRNGKey(0)
    k1, k2, k3 = jax.random.split(key, 3)
    batch, hidden = 8, 32
    anchor_cls = jax.random.normal(k1, (batch, hidden), dtype=jnp.float32)
    positive_cls = jax.random.normal(k2, (batch, hidden), dtype=jnp.float32)
    negative_cls = jax.random.normal(k3, (batch, hidden), dtype=jnp.float32)

    out = jax.block_until_ready(triplet_loss(anchor_cls, positive_cls, negative_cls))
    ref = _reference(anchor_cls, positive_cls, negative_cls)
    assert jnp.abs(out - ref) < 1e-4, (out, ref)

    # Ragged, multi-tile case: exercises pipelined batch tiling, the gated
    # tail-row masking and (on v7x) the even 2-way TensorCore split.
    k4, k5, k6 = jax.random.split(jax.random.PRNGKey(1), 3)
    batch2, hidden2 = 300, 128
    a2 = jax.random.normal(k4, (batch2, hidden2), dtype=jnp.float32)
    p2 = jax.random.normal(k5, (batch2, hidden2), dtype=jnp.float32)
    n2 = jax.random.normal(k6, (batch2, hidden2), dtype=jnp.float32)

    out2 = jax.block_until_ready(triplet_loss(a2, p2, n2, tile_rows=64))
    ref2 = _reference(a2, p2, n2)
    assert jnp.abs(out2 - ref2) < 1e-4, (out2, ref2)

    # bf16 inputs: exercises the single-cast diff path (wider tolerance).
    k7, k8, k9 = jax.random.split(jax.random.PRNGKey(2), 3)
    a3 = jax.random.normal(k7, (64, 128), dtype=jnp.bfloat16)
    p3 = jax.random.normal(k8, (64, 128), dtype=jnp.bfloat16)
    n3 = jax.random.normal(k9, (64, 128), dtype=jnp.bfloat16)
    out3 = jax.block_until_ready(triplet_loss(a3, p3, n3))
    ref3 = _reference(a3, p3, n3)
    assert jnp.abs(out3 - ref3) < 5e-2, (out3, ref3)

    print("KERNEL_OK")
</pallas_src>

<mosaic_0001>
module attributes {stable_mosaic.version = 11 : i64} {
  func.func @_triplet_kernel(%arg0: i32, %arg1: i32, %arg2: memref<8x32xf32, #tpu.memory_space<vmem>>, %arg3: memref<8x32xf32, #tpu.memory_space<vmem>>, %arg4: memref<8x32xf32, #tpu.memory_space<vmem>>, %arg5: memref<1x1xf32, #tpu.memory_space<smem>>, %arg6: memref<1x1xf32, #tpu.memory_space<vmem>>) attributes {dimension_semantics = [#tpu.dimension_semantics<parallel>, #tpu.dimension_semantics<arbitrary>], iteration_bounds = array<i64: 1, 1>, scalar_prefetch = 0 : i64, scratch_operands = 1 : i64, tpu.core_type = #tpu.core_type<tc>, window_params = [{transform_indices = @transform_0, window_bounds = array<i64: 8, 32>}, {transform_indices = @transform_1, window_bounds = array<i64: 8, 32>}, {transform_indices = @transform_2, window_bounds = array<i64: 8, 32>}, {transform_indices = @transform_3, window_bounds = array<i64: 1, 1>}]} {
    %c0_i32 = arith.constant 0 : i32
    %0 = arith.cmpi eq, %arg1, %c0_i32 : i32
    %1 = arith.extui %0 : i1 to i32
    %c0_i32_0 = arith.constant 0 : i32
    %2 = arith.cmpi ne, %1, %c0_i32_0 : i32
    scf.if %2 {
      %cst_17 = arith.constant 0.000000e+00 : f32
      %38 = vector.broadcast %cst_17 : f32 to vector<1x1xf32>
      %c0_18 = arith.constant 0 : index
      %c0_19 = arith.constant 0 : index
      %39 = vector.load %arg6[%c0_18, %c0_19] : memref<1x1xf32, #tpu.memory_space<vmem>>, vector<1x1xf32>
      tpu.vector_store %arg6[%c0_18, %c0_19], %38 {strides = array<i32>} : memref<1x1xf32, #tpu.memory_space<vmem>>, vector<1x1xf32>,
    } else {
    }
    %c0 = arith.constant 0 : index
    %c0_1 = arith.constant 0 : index
    %3 = vector.load %arg2[%c0, %c0_1] : memref<8x32xf32, #tpu.memory_space<vmem>>, vector<8x32xf32>
    %c0_2 = arith.constant 0 : index
    %c0_3 = arith.constant 0 : index
    %4 = vector.load %arg3[%c0_2, %c0_3] : memref<8x32xf32, #tpu.memory_space<vmem>>, vector<8x32xf32>
    %5 = arith.subf %3, %4 : vector<8x32xf32>
    %cst = arith.constant 1.000000e-07 : f32
    %6 = vector.broadcast %cst : f32 to vector<8x32xf32>
    %7 = arith.addf %5, %6 : vector<8x32xf32>
    %c0_4 = arith.constant 0 : index
    %c0_5 = arith.constant 0 : index
    %8 = vector.load %arg4[%c0_4, %c0_5] : memref<8x32xf32, #tpu.memory_space<vmem>>, vector<8x32xf32>
    %9 = arith.subf %3, %8 : vector<8x32xf32>
    %cst_6 = arith.constant 1.000000e-07 : f32
    %10 = vector.broadcast %cst_6 : f32 to vector<8x32xf32>
    %11 = arith.addf %9, %10 : vector<8x32xf32>
    %12 = arith.mulf %7, %7 : vector<8x32xf32>
    %cst_7 = arith.constant dense<0.000000e+00> : vector<8xf32>
    %13 = vector.multi_reduction <add>, %12, %cst_7 [1] : vector<8x32xf32> to vector<8xf32>
    %14 = vector.shape_cast %13 : vector<8xf32> to vector<8x1xf32>
    %15 = math.sqrt %14 : vector<8x1xf32>
    %16 = arith.mulf %11, %11 : vector<8x32xf32>
    %cst_8 = arith.constant dense<0.000000e+00> : vector<8xf32>
    %17 = vector.multi_reduction <add>, %16, %cst_8 [1] : vector<8x32xf32> to vector<8xf32>
    %18 = vector.shape_cast %17 : vector<8xf32> to vector<8x1xf32>
    %19 = math.sqrt %18 : vector<8x1xf32>
    %20 = arith.subf %15, %19 : vector<8x1xf32>
    %cst_9 = arith.constant 1.000000e+00 : f32
    %21 = vector.broadcast %cst_9 : f32 to vector<8x1xf32>
    %22 = arith.addf %20, %21 : vector<8x1xf32>
    %cst_10 = arith.constant 0.000000e+00 : f32
    %23 = vector.broadcast %cst_10 : f32 to vector<8x1xf32>
    %24 = arith.maximumf %22, %23 : vector<8x1xf32>
    %c1_i32 = arith.constant 1 : i32
    %25 = arith.muli %arg0, %c1_i32 : i32
    %26 = arith.addi %25, %arg1 : i32
    %c8_i32 = arith.constant 8 : i32
    %27 = arith.muli %26, %c8_i32 : i32
    %c8_i32_11 = arith.constant 8 : i32
    %28 = arith.addi %27, %c8_i32_11 : i32
    %c8_i32_12 = arith.constant 8 : i32
    %29 = arith.cmpi sgt, %28, %c8_i32_12 : i32
    %true = arith.constant true
    %30 = arith.xori %29, %true : i1
    %31 = arith.extui %30 : i1 to i32
    %c0_i32_13 = arith.constant 0 : i32
    %32 = arith.cmpi ne, %31, %c0_i32_13 : i32
    scf.if %32 {
      %c0_17 = arith.constant 0 : index
      %c0_18 = arith.constant 0 : index
      %38 = vector.load %arg6[%c0_17, %c0_18] : memref<1x1xf32, #tpu.memory_space<vmem>>, vector<1x1xf32>
      %39 = vector.shape_cast %24 : vector<8x1xf32> to vector<1x8x1xf32>
      %cst_19 = arith.constant dense<0.000000e+00> : vector<1xf32>
      %40 = vector.multi_reduction <add>, %39, %cst_19 [1, 2] : vector<1x8x1xf32> to vector<1xf32>
      %41 = vector.shape_cast %40 : vector<1xf32> to vector<1x1x1xf32>
      %42 = vector.extract %41[0, 0, 0] : f32 from vector<1x1x1xf32>
      %43 = vector.broadcast %42 : f32 to vector<1x1xf32>
      %44 = arith.addf %38, %43 : vector<1x1xf32>
      %c0_20 = arith.constant 0 : index
      %c0_21 = arith.constant 0 : index
      %45 = vector.load %arg6[%c0_20, %c0_21] : memref<1x1xf32, #tpu.memory_space<vmem>>, vector<1x1xf32>
      tpu.vector_store %arg6[%c0_20, %c0_21], %44 {strides = array<i32>} : memref<1x1xf32, #tpu.memory_space<vmem>>, vector<1x1xf32>,
    } else {
    }
    %33 = arith.extui %29 : i1 to i32
    %c0_i32_14 = arith.constant 0 : i32
    %34 = arith.cmpi ne, %33, %c0_i32_14 : i32
    scf.if %34 {
      %38 = tpu.iota {dimensions = array<i32: 0>} : vector<8x1xi32>
      %39 = vector.broadcast %27 : i32 to vector<8x1xi32>
      %40 = arith.addi %38, %39 : vector<8x1xi32>
      %c8_i32_17 = arith.constant 8 : i32
      %41 = vector.broadcast %c8_i32_17 : i32 to vector<8x1xi32>
      %42 = arith.cmpi slt, %40, %41 : vector<8x1xi32>
      %cst_18 = arith.constant 0.000000e+00 : f32
      %43 = vector.broadcast %cst_18 : f32 to vector<8x1xf32>
      %44 = arith.select %42, %24, %43 : vector<8x1xi1>, vector<8x1xf32>
      %c0_19 = arith.constant 0 : index
      %c0_20 = arith.constant 0 : index
      %45 = vector.load %arg6[%c0_19, %c0_20] : memref<1x1xf32, #tpu.memory_space<vmem>>, vector<1x1xf32>
      %46 = vector.shape_cast %44 : vector<8x1xf32> to vector<1x8x1xf32>
      %cst_21 = arith.constant dense<0.000000e+00> : vector<1xf32>
      %47 = vector.multi_reduction <add>, %46, %cst_21 [1, 2] : vector<1x8x1xf32> to vector<1xf32>
      %48 = vector.shape_cast %47 : vector<1xf32> to vector<1x1x1xf32>
      %49 = vector.extract %48[0, 0, 0] : f32 from vector<1x1x1xf32>
      %50 = vector.broadcast %49 : f32 to vector<1x1xf32>
      %51 = arith.addf %45, %50 : vector<1x1xf32>
      %c0_22 = arith.constant 0 : index
      %c0_23 = arith.constant 0 : index
      %52 = vector.load %arg6[%c0_22, %c0_23] : memref<1x1xf32, #tpu.memory_space<vmem>>, vector<1x1xf32>
      tpu.vector_store %arg6[%c0_22, %c0_23], %51 {strides = array<i32>} : memref<1x1xf32, #tpu.memory_space<vmem>>, vector<1x1xf32>,
    } else {
    }
    %c0_i32_15 = arith.constant 0 : i32
    %35 = arith.cmpi eq, %arg1, %c0_i32_15 : i32
    %36 = arith.extui %35 : i1 to i32
    %c0_i32_16 = arith.constant 0 : i32
    %37 = arith.cmpi ne, %36, %c0_i32_16 : i32
    scf.if %37 {
      %c0_17 = arith.constant 0 : index
      %c0_18 = arith.constant 0 : index
      %38 = vector.load %arg6[%c0_17, %c0_18] : memref<1x1xf32, #tpu.memory_space<vmem>>, vector<1x1xf32>
      %39 = vector.shape_cast %38 : vector<1x1xf32> to vector<1x1x1xf32>
      %cst_19 = arith.constant dense<0.000000e+00> : vector<1xf32>
      %40 = vector.multi_reduction <add>, %39, %cst_19 [1, 2] : vector<1x1x1xf32> to vector<1xf32>
      %41 = vector.shape_cast %40 : vector<1xf32> to vector<1x1x1xf32>
      %42 = vector.extract %41[0, 0, 0] : f32 from vector<1x1x1xf32>
      %c0_20 = arith.constant 0 : index
      %c0_21 = arith.constant 0 : index
      %43 = memref.load %arg5[%c0_20, %c0_21] : memref<1x1xf32, #tpu.memory_space<smem>>
      memref.store %42, %arg5[%c0_20, %c0_21] : memref<1x1xf32, #tpu.memory_space<smem>>
    } else {
    }
    return
  }
  func.func @transform_0(%arg0: i32, %arg1: i32) -> (i32, i32) {
    %c1_i32 = arith.constant 1 : i32
    %0 = arith.muli %arg0, %c1_i32 : i32
    %1 = arith.addi %0, %arg1 : i32
    %c0_i32 = arith.constant 0 : i32
    %c0_i32_0 = arith.constant 0 : i32
    return %1, %c0_i32 : i32, i32
  }
  func.func @transform_1(%arg0: i32, %arg1: i32) -> (i32, i32) {
    %c1_i32 = arith.constant 1 : i32
    %0 = arith.muli %arg0, %c1_i32 : i32
    %1 = arith.addi %0, %arg1 : i32
    %c0_i32 = arith.constant 0 : i32
    %c0_i32_0 = arith.constant 0 : i32
    return %1, %c0_i32 : i32, i32
  }
  func.func @transform_2(%arg0: i32, %arg1: i32) -> (i32, i32) {
    %c1_i32 = arith.constant 1 : i32
    %0 = arith.muli %arg0, %c1_i32 : i32
    %1 = arith.addi %0, %arg1 : i32
    %c0_i32 = arith.constant 0 : i32
    %c0_i32_0 = arith.constant 0 : i32
    return %1, %c0_i32 : i32, i32
  }
  func.func @transform_3(%arg0: i32, %arg1: i32) -> (i32, i32) {
    %c0_i32 = arith.constant 0 : i32
    %c0_i32_0 = arith.constant 0 : i32
    return %arg0, %c0_i32 : i32, i32
  }
}

</mosaic_0001>

<llo_original>
// kernel: tpu_custom_call.1
$region0: #{tpu_custom_call.1}
  #allocation0 [shape = 'u32[]', space=smem, size = 0x4, offset = 0x4, fixed_abs, tag = 'smem constant byte address 0x4 - core index']
  #allocation1 [shape = 'u32[144,128]{1,0:T(1,128)}', space=vmem, size = 0x12000, scoped, tag = 'internal scratch']
  #allocation2 [shape = 'f32[1,1]{1,0:T(1,128)}', space=vmem, size = 0x200, scoped, tag = 'scratch operand']
  %s0 = inlined_call_operand.hbm [shape: f32[8,32], index: 0, kind: input, shape index: {}]
  %s1 = inlined_call_operand.hbm [shape: f32[8,32], index: 1, kind: input, shape index: {}]
  %s2 = inlined_call_operand.hbm [shape: f32[8,32], index: 2, kind: input, shape index: {}]
  %s3 = inlined_call_operand.hbm [shape: f32[1,1], index: 3, kind: output, shape index: {}]
  %s4 = sld [smem:[#allocation0]]
  $region50: #{tpu_custom_call.1} parent=0
    _
  %s6 = ssub.s32 1, %s4
  %s7 = scalar_select 0, %s6, %s4
  $region1: #{tpu_custom_call.1} parent=0
    #allocation3 [shape = 'u8[4096]{0}', space=vmem, size = 0x1000, scoped, tag = 'input window, operand 0, single buffered']
    #allocation4 [shape = 's32[1]{0}', space=sflag, size = 0x4, scoped, tag = 'scoped memory for tpu_custom_call.1']
    #allocation5 [shape = 's32[1]{0}', space=sflag, size = 0x4, scoped, tag = 'scoped memory for tpu_custom_call.1']
    #allocation6 [shape = 'u8[4096]{0}', space=vmem, size = 0x1000, scoped, tag = 'input window, operand 1, single buffered']
    #allocation7 [shape = 's32[1]{0}', space=sflag, size = 0x4, scoped, tag = 'scoped memory for tpu_custom_call.1']
    #allocation8 [shape = 'u8[4096]{0}', space=vmem, size = 0x1000, scoped, tag = 'input window, operand 2, single buffered']
    #allocation9 [shape = 'u8[512]{0}', space=smem, size = 0x200, scoped, tag = 'output window, operand 0, single buffered']
    %8 = vsyncpa [#allocation4], 0
    %9 = vsyncpa [#allocation7], 0
    %10 = vsyncpa [#allocation5], 0
    // Predicated region
    $region2: #{tpu_custom_call.1} parent=1 // pred_check
      _
    $region3: #{tpu_custom_call.1} parent=1 // pred_check_branch
      %12 = sbr.rel (0) target = $region5
    $region4: #{tpu_custom_call.1} parent=1 // pred_region
      %s13 = sadd.s32 0, 0
      %s15 = ssub.s32 128, 128
      %16 = vsyncadd [#allocation4], %s15
      %s17 = smul.addr %s13, 128
      %s18 = scalar_lea.hbm %s0, %s17
      %s20 = sshll.u32 [#allocation3], 4
      %s21 = int_to_ptr.vmem [resolvable:$true] %s20
      %23 = dma.hbm_to_vmem [thread:$0]  %s18, 128, %s21, [#allocation4]
    $region5: #{tpu_custom_call.1} parent=1 // pred_fallthru
      _
    // Predicated region
    $region6: #{tpu_custom_call.1} parent=1 // pred_check
      _
    $region7: #{tpu_custom_call.1} parent=1 // pred_check_branch
      %25 = sbr.rel (0) target = $region9
    $region8: #{tpu_custom_call.1} parent=1 // pred_region
      %s26 = sadd.s32 0, 0
      %s28 = ssub.s32 128, 128
      %29 = vsyncadd [#allocation7], %s28
      %s30 = smul.addr %s26, 128
      %s31 = scalar_lea.hbm %s1, %s30
      %s33 = sshll.u32 [#allocation6], 4
      %s34 = int_to_ptr.vmem [resolvable:$true] %s33
      %36 = dma.hbm_to_vmem [thread:$0]  %s31, 128, %s34, [#allocation7]
    $region9: #{tpu_custom_call.1} parent=1 // pred_fallthru
      _
    // Predicated region
    $region10: #{tpu_custom_call.1} parent=1 // pred_check
      _
    $region11: #{tpu_custom_call.1} parent=1 // pred_check_branch
      %38 = sbr.rel (0) target = $region13
    $region12: #{tpu_custom_call.1} parent=1 // pred_region
      %s39 = sadd.s32 0, 0
      %s41 = ssub.s32 128, 128
      %42 = vsyncadd [#allocation7], %s41
      %s43 = smul.addr %s39, 128
      %s44 = scalar_lea.hbm %s2, %s43
      %s46 = sshll.u32 [#allocation8], 4
      %s47 = int_to_ptr.vmem [resolvable:$true] %s46
      %49 = dma.hbm_to_vmem [thread:$0]  %s44, 128, %s47, [#allocation7]
    $region13: #{tpu_custom_call.1} parent=1 // pred_fallthru
      _
    // Predicated region
    $region14: #{tpu_custom_call.1} parent=1 // pred_check
      _
    $region15: #{tpu_custom_call.1} parent=1 // pred_check_branch
      %51 = sbr.rel (0) target = $region17
    $region16: #{tpu_custom_call.1} parent=1 // pred_region
      %52 = dma.done [#allocation4], 128
    $region17: #{tpu_custom_call.1} parent=1 // pred_fallthru
      _
    // Predicated region
    $region18: #{tpu_custom_call.1} parent=1 // pred_check
      _
    $region19: #{tpu_custom_call.1} parent=1 // pred_check_branch
      %54 = sbr.rel (0) target = $region21
    $region20: #{tpu_custom_call.1} parent=1 // pred_region
      %55 = dma.done [#allocation7], 128
    $region21: #{tpu_custom_call.1} parent=1 // pred_fallthru
      _
    // Predicated region
    $region22: #{tpu_custom_call.1} parent=1 // pred_check
      _
    $region23: #{tpu_custom_call.1} parent=1 // pred_check_branch
      %57 = sbr.rel (0) target = $region25
    $region24: #{tpu_custom_call.1} parent=1 // pred_region
      %58 = dma.done [#allocation7], 128
    $region25: #{tpu_custom_call.1} parent=1 // pred_fallthru
      _
    %s59 = sadd.s32 0, 0
    %s60 = sadd.s32 0, 0
    %s61 = sadd.s32 0, 0
    %p62 = scmp.eq.s32.totalorder 0, 0
    // Predicated region
    $region26: #{tpu_custom_call.1} parent=1 // pred_check
      %p63 = pneg %p62
    $region27: #{tpu_custom_call.1} parent=1 // pred_check_branch
      %65 = sbr.rel (%p63) target = $region29
    $region28: #{tpu_custom_call.1} parent=1 // pred_region
      %vm66 = vcmask 0
      %67 = vst.msk [vmem:[#allocation2] sm:$0x1] %vm66, 0.0
    $region29: #{tpu_custom_call.1} parent=1 // pred_fallthru
      _
    %v68 = vld [vmem:[#allocation3] sm:$0xff]
    %v69 = vld [vmem:[#allocation6] sm:$0xff]
    %v70 = vsub.f32 %v68, %v69
    %v71 = vadd.f32 %v70, 1e-07
    %v72 = vld [vmem:[#allocation8] sm:$0xff]
    %v73 = vsub.f32 %v68, %v72
    %v74 = vadd.f32 %v73, 1e-07
    %v75 = vmul.f32 %v71, %v71
    %vm76 = vcmask 261120
    %v77 = vsel %vm76, %v75, 0.0
    %78 = vadd.xlane.f32.xlu0 %v77
    %v79 = vpop.xlane.xlu0 %78
    %v80 = vrsqrt.pop %v79
    %v81 = vmul.f32 %v79, %v80
    %vm82 = vcmp.eq.f32.partialorder %v79, inf
    %v83 = vsel %vm82, %v79, %v81
    %vm84 = vcmp.eq.f32.partialorder %v79, 0.0
    %v85 = vand.u32 %v79, 2147483648
    %v86 = vsel %vm84, %v85, %v83
    %v87 = vmul.f32 %v74, %v74
    %v88 = vsel %vm76, %v87, 0.0
    %89 = vadd.xlane.f32.xlu0 %v88
    %v90 = vpop.xlane.xlu0 %89
    %v91 = vrsqrt.pop %v90
    %v92 = vmul.f32 %v90, %v91
    %vm93 = vcmp.eq.f32.partialorder %v90, inf
    %v94 = vsel %vm93, %v90, %v92
    %vm95 = vcmp.eq.f32.partialorder %v90, 0.0
    %v96 = vand.u32 %v90, 2147483648
    %v97 = vsel %vm95, %v96, %v94
    %v98 = vsub.f32 %v86, %v97
    %v99 = vadd.f32 %v98, 1.0
    %v100 = vmax.f32 %v99, 0.0
    %s101 = sadd.s32 0, 0
    %s102 = smul.u32 %s101, 8
    %s103 = sadd.s32 %s102, 8
    %p104 = scmp.gt.s32.totalorder %s103, 8
    %p105 = scmp.le.s32.totalorder %s103, 8
    // Predicated region
    $region30: #{tpu_custom_call.1} parent=1 // pred_check
      %p106 = pneg %p105
    $region31: #{tpu_custom_call.1} parent=1 // pred_check_branch
      %108 = sbr.rel (%p106) target = $region33
    $region32: #{tpu_custom_call.1} parent=1 // pred_region
      %v109 = vld [vmem:[#allocation2] sm:$0x1]
      %vm110 = vcmask 7168
      %v111 = vsel %vm110, %v100, 0.0
      %112 = vadd.xlane.f32.xlu0 %v111
      %v113 = vpop.xlane.xlu0 %112
      %v114 = vrot.slane %v113, 4
      %v115 = vadd.f32 %v113, %v114
      %v116 = vrot.slane %v115, 2
      %v117 = vadd.f32 %v115, %v116
      %v118 = vrot.slane %v117, 1
      %v119 = vadd.f32 %v117, %v118
      %s120 = vtos %v119
      %v121 = vstv %s120
      %v122 = vadd.f32 %v109, %v121
      %vm123 = vcmask 0
      %124 = vst.msk [vmem:[#allocation2] sm:$0x1] %vm123, %v122
    $region33: #{tpu_custom_call.1} parent=1 // pred_fallthru
      _
    // Predicated region
    $region34: #{tpu_custom_call.1} parent=1 // pred_check
      %p125 = pneg %p104
    $region35: #{tpu_custom_call.1} parent=1 // pred_check_branch
      %127 = sbr.rel (%p125) target = $region37
    $region36: #{tpu_custom_call.1} parent=1 // pred_region
      %v128 = vlaneseq
      %v129 = vshrl.u32 %v128, 7
      %v130 = vstv %s102
      %v131 = vadd.s32 %v129, %v130
      %vm132 = vcmp.lt.s32.totalorder %v131, 8
      %v133 = vsel %vm132, %v100, 0.0
      %v134 = vld [vmem:[#allocation2] sm:$0x1]
      %vm135 = vcmask 7168
      %v136 = vsel %vm135, %v133, 0.0
      %137 = vadd.xlane.f32.xlu0 %v136
      %v138 = vpop.xlane.xlu0 %137
      %v139 = vrot.slane %v138, 4
      %v140 = vadd.f32 %v138, %v139
      %v141 = vrot.slane %v140, 2
      %v142 = vadd.f32 %v140, %v141
      %v143 = vrot.slane %v142, 1
      %v144 = vadd.f32 %v142, %v143
      %s145 = vtos %v144
      %v146 = vstv %s145
      %v147 = vadd.f32 %v134, %v146
      %vm148 = vcmask 0
      %149 = vst.msk [vmem:[#allocation2] sm:$0x1] %vm148, %v147
    $region37: #{tpu_custom_call.1} parent=1 // pred_fallthru
      _
    // Predicated region
    $region38: #{tpu_custom_call.1} parent=1 // pred_check
      %p150 = pneg %p62
    $region39: #{tpu_custom_call.1} parent=1 // pred_check_branch
      %152 = sbr.rel (%p150) target = $region41
    $region40: #{tpu_custom_call.1} parent=1 // pred_region
      %v153 = vld [vmem:[#allocation2] sm:$0x1]
      %v154 = vadd.f32 %v153, 0.0
      %s155 = vtos %v154
      %s156 = scalar_lea.smem [#allocation9], 0
      %157 = sst [smem:[%s156]] %s155
    $region41: #{tpu_custom_call.1} parent=1 // pred_fallthru
      _
    // Predicated region
    $region42: #{tpu_custom_call.1} parent=1 // pred_check
      _
    $region43: #{tpu_custom_call.1} parent=1 // pred_check_branch
      %159 = sbr.rel (0) target = $region45
    $region44: #{tpu_custom_call.1} parent=1 // pred_region
      %s161 = ssub.s32 16, 16
      %162 = vsyncadd [#allocation5], %s161
      %165 = dma.smem_to_hbm [#allocation9], 16, %s3, [#allocation5]
    $region45: #{tpu_custom_call.1} parent=1 // pred_fallthru
      _
    // Predicated region
    $region46: #{tpu_custom_call.1} parent=1 // pred_check
      _
    $region47: #{tpu_custom_call.1} parent=1 // pred_check_branch
      %167 = sbr.rel (0) target = $region49
    $region48: #{tpu_custom_call.1} parent=1 // pred_region
      %168 = dma.done [#allocation5], 16
    $region49: #{tpu_custom_call.1} parent=1 // pred_fallthru
      _
    %169 = sfence
    %170 = vsyncpa [#allocation4], 1
    %171 = vsyncpa [#allocation7], 1
    %172 = vsyncpa [#allocation5], 1

</llo_original>
